<compile_context>
chip_gen: v7x
topology: tpu7x:2x2x1
jax: 0.10.0
libtpu: 0.0.40
codegen_flags: <defaults>
</compile_context>

<pallas_src>
import functools

import jax
import jax.numpy as jnp
from jax.experimental import pallas as pl
from jax.experimental.pallas import tpu as pltpu

_LANE = 128
_MAX_TILE_HW = 2048        # spatial tile cap: HBM roofline saturates well below VMEM capacity
_MAX_MXU_POOL_HW = 4096    # cap on the ones-column length used for MXU pooling (fused path)


def _round_up(x, m):
    return (x + m - 1) // m * m


def _vmem_budget_bytes():
    # ~75% of physical VMEM: ~96 MiB on v5e/v6e (128 MiB), ~48 MiB on v7x (64 MiB).
    try:
        cap = pltpu.get_tpu_info().vmem_capacity_bytes
    except Exception:
        cap = 64 * 1024 * 1024  # conservative default (v7x-sized)
    return int(cap) * 3 // 4


def _spec(block_shape, index_map, buffer_count=None):
    """BlockSpec with optional explicit pipeline buffer depth (fallback-safe)."""
    if buffer_count is not None and hasattr(pl, "Buffered"):
        try:
            return pl.BlockSpec(block_shape, index_map,
                                pipeline_mode=pl.Buffered(buffer_count))
        except TypeError:
            pass
    return pl.BlockSpec(block_shape, index_map)


# --------------------------------------------------------------------------
# Kernels
# --------------------------------------------------------------------------
def _cse_fused_kernel(x_ref, w1_ref, b1_ref, w2_ref, b2_ref, o_ref, *,
                      inv_hw, mxu_pool):
    """One batch element: pool + MLP + sigmoid + gate; x read from HBM once."""
    x = x_ref[...]                                             # (C, HW) native dtype
    if mxu_pool:
        # Lane-direction reduce on the otherwise-idle MXU slot (no f32 copy of x).
        ones = jnp.ones((x.shape[-1], 1), dtype=x.dtype)
        pooled = jnp.dot(x, ones, preferred_element_type=jnp.float32) * inv_hw
    else:
        pooled = jnp.sum(x.astype(jnp.float32), axis=-1, keepdims=True) * inv_hw
    z1 = jnp.dot(w1_ref[...], pooled,
                 preferred_element_type=jnp.float32) + b1_ref[...]   # (Cr, 1)
    z1 = jnp.maximum(z1, 0.0)
    z2 = jnp.dot(w2_ref[...], z1,
                 preferred_element_type=jnp.float32) + b2_ref[...]   # (C, 1)
    gate = jax.nn.sigmoid(z2)
    # Gate cast to x.dtype before the multiply (matches framework behavior).
    o_ref[...] = (x * gate.astype(x.dtype)).astype(o_ref.dtype)


def _pool_kernel(x_ref, sum_ref):
    """Spatial-tiled pooling sums. Grid = (N, split, n_hw); last axis reduces."""
    h = pl.program_id(2)

    @pl.when(h == 0)
    def _():
        sum_ref[...] = jnp.zeros_like(sum_ref)

    x = x_ref[...]                                             # (C, t_hw)
    ones = jnp.ones((x.shape[-1], 1), dtype=x.dtype)
    # MXU reduce: zero spatial padding contributes nothing to the sum.
    sum_ref[...] += jnp.dot(x, ones, preferred_element_type=jnp.float32)


def _gate_kernel(x_ref, g_ref, o_ref):
    """Spatial-tiled gating: out = x * gate (gate broadcast over lanes)."""
    x = x_ref[...]                                             # (C, t_hw)
    o_ref[...] = (x * g_ref[...].astype(x.dtype)).astype(o_ref.dtype)


# --------------------------------------------------------------------------
# Wrapper
# --------------------------------------------------------------------------
def cse_forward(x_nchw, w1, b1, w2, b2, *, force_tiled=False,
                max_tile_hw=_MAX_TILE_HW):
    """x_nchw: (N, C, H, W). w1: (C//r, C), b1: (C//r,), w2: (C, C//r), b2: (C,)."""
    N, C, H, W = x_nchw.shape
    Cr = w1.shape[0]
    HW = H * W

    x_dtype = x_nchw.dtype
    itemsize = jnp.dtype(x_dtype).itemsize
    budget = _vmem_budget_bytes()

    # Free, layout-preserving reshape: no channel padding, no HBM copy.
    x_flat = x_nchw.reshape(N, C, HW)

    w1_f = w1.astype(jnp.float32)
    b1_f = b1.astype(jnp.float32)
    w2_f = w2.astype(jnp.float32)
    b2_f = b2.astype(jnp.float32)
    inv_hw = 1.0 / float(HW)
    param_bytes = 4 * (w1_f.size + b1_f.size + w2_f.size + b2_f.size)

    # -------------------- fused fast path (x read exactly once) --------------------
    slab = C * HW * itemsize
    mxu_pool = HW <= _MAX_MXU_POOL_HW
    ones_bytes = (_round_up(HW, 8) // 8) * 4096 if mxu_pool else 0  # worst-case (K,1) tiling
    fixed = 2 * param_bytes + ones_bytes + (2 << 20)
    fits_double = 4 * slab + fixed <= budget     # double-buffered in + out slabs
    fits_single = 2 * slab + fixed <= budget     # single-buffered in + out slabs

    if (not force_tiled) and (fits_double or fits_single):
        cost = pl.CostEstimate(
            flops=int(N * (3 * C * HW + 4 * C * Cr)),
            transcendentals=int(N * C),
            bytes_accessed=int(2 * N * slab + param_bytes))

        def _run_fused(buf):
            return pl.pallas_call(
                functools.partial(_cse_fused_kernel, inv_hw=inv_hw,
                                  mxu_pool=mxu_pool),
                out_shape=jax.ShapeDtypeStruct((N, C, HW), x_dtype),
                grid_spec=pltpu.PrefetchScalarGridSpec(
                    num_scalar_prefetch=0,
                    grid=(N,),
                    in_specs=[
                        _spec((pl.Squeezed(), C, HW), lambda b: (b, 0, 0), buf),
                        pl.BlockSpec((Cr, C), lambda b: (0, 0)),
                        pl.BlockSpec((Cr, 1), lambda b: (0, 0)),
                        pl.BlockSpec((C, Cr), lambda b: (0, 0)),
                        pl.BlockSpec((C, 1), lambda b: (0, 0)),
                    ],
                    out_specs=_spec((pl.Squeezed(), C, HW), lambda b: (b, 0, 0), buf),
                ),
                compiler_params=pltpu.CompilerParams(
                    dimension_semantics=("parallel",),
                    vmem_limit_bytes=budget),
                cost_estimate=cost,
            )(x_flat, w1_f, b1_f.reshape(Cr, 1), w2_f, b2_f.reshape(C, 1))

        # N == 1: no cross-step pipelining possible anyway -> single buffering
        # saves VMEM for free.  Otherwise single-buffer only when the
        # double-buffered slab does not fit (keeps more shapes on the
        # 2x-HBM-traffic fused path under v7x's 64 MiB VMEM).
        buf = 1 if (N == 1 or not fits_double) else None
        out = None
        try:
            out = _run_fused(buf)
        except Exception:
            # Explicit single-buffering unsupported / rejected: retry default
            # pipelining if it fits, otherwise fall through to the tiled path.
            if fits_double:
                out = _run_fused(None)
        if out is not None:
            return out.reshape(N, C, H, W)

    # -------------------- tiled three-pass path --------------------
    # Spatial tile: multiple of 128 lanes, capped (roofline saturates around
    # 512-1024 lanes), and clamped so double-buffered in+out tiles fit VMEM.
    t_cap = max(_LANE, (budget // (8 * C * itemsize)) // _LANE * _LANE)
    t_hw = min(max_tile_hw, t_cap, _round_up(HW, _LANE))
    t_hw = max(_LANE, (t_hw // _LANE) * _LANE)

    # Split the pooling reduction into a leading "parallel" axis when N == 1 so
    # both v7x TensorCores get work; partial sums are combined in the wrapper.
    split = 2 if (N == 1 and HW > t_hw) else 1
    n_hw_inner = pl.cdiv(HW, t_hw * split)
    n_hw = n_hw_inner * split
    HW_grid = n_hw * t_hw

    # Pad the spatial dim only when strictly needed (single pad, no channel pad).
    x_t = x_flat if HW_grid == HW else jnp.pad(
        x_flat, ((0, 0), (0, 0), (0, HW_grid - HW)))

    # Pass 1: pooled sums (f32 resident accumulator across the reduction axis).
    pool_cost = pl.CostEstimate(
        flops=int(2 * N * C * HW_grid),
        transcendentals=0,
        bytes_accessed=int(N * C * HW_grid * itemsize + N * split * C * 4))
    part_sums = pl.pallas_call(
        _pool_kernel,
        out_shape=jax.ShapeDtypeStruct((N, split, C, 1), jnp.float32),
        grid_spec=pltpu.PrefetchScalarGridSpec(
            num_scalar_prefetch=0,
            grid=(N, split, n_hw_inner),
            in_specs=[pl.BlockSpec(
                (pl.Squeezed(), C, t_hw),
                lambda b, p, h: (b, 0, p * n_hw_inner + h))],
            out_specs=pl.BlockSpec(
                (pl.Squeezed(), pl.Squeezed(), C, 1),
                lambda b, p, h: (b, p, 0, 0)),
        ),
        compiler_params=pltpu.CompilerParams(
            dimension_semantics=("parallel", "parallel", "arbitrary"),
            vmem_limit_bytes=budget),
        cost_estimate=pool_cost,
    )(x_t)

    # Pass 2: the squeeze-excite MLP touches kilobytes — plain JAX/XLA, no
    # extra kernel dispatch or padding plumbing.
    pooled = part_sums.sum(axis=(1, 3)) * inv_hw                  # (N, C) f32
    z1 = jax.nn.relu(pooled @ w1_f.T + b1_f)                      # (N, Cr)
    gate = jax.nn.sigmoid(z1 @ w2_f.T + b2_f).reshape(N, C, 1)    # (N, C, 1) f32

    # Pass 3: gating; both grid axes parallel (both v7x TCs busy even at N == 1).
    gate_cost = pl.CostEstimate(
        flops=int(N * C * HW_grid),
        transcendentals=0,
        bytes_accessed=int(2 * N * C * HW_grid * itemsize + N * C * 4))
    out = pl.pallas_call(
        _gate_kernel,
        out_shape=jax.ShapeDtypeStruct((N, C, HW_grid), x_dtype),
        grid_spec=pltpu.PrefetchScalarGridSpec(
            num_scalar_prefetch=0,
            grid=(N, n_hw),
            in_specs=[
                pl.BlockSpec((pl.Squeezed(), C, t_hw), lambda b, h: (b, 0, h)),
                pl.BlockSpec((pl.Squeezed(), C, 1), lambda b, h: (b, 0, 0)),
            ],
            out_specs=pl.BlockSpec((pl.Squeezed(), C, t_hw), lambda b, h: (b, 0, h)),
        ),
        compiler_params=pltpu.CompilerParams(
            dimension_semantics=("parallel", "parallel"),
            vmem_limit_bytes=budget),
        cost_estimate=gate_cost,
    )(x_t, gate)

    if HW_grid != HW:
        out = out[:, :, :HW]
    return out.reshape(N, C, H, W)


if __name__ == "__main__":
    key = jax.random.PRNGKey(0)
    N, C, H, W = 2, 4, 16, 16
    reduction = 2
    Cr = C // reduction

    kx, k1, k2, k3, k4 = jax.random.split(key, 5)
    x = jax.random.normal(kx, (N, C, H, W), dtype=jnp.float32)
    # 1x1 conv weights squeezed from (out, in, 1, 1) to (out, in).
    w1 = jax.random.normal(k1, (Cr, C), dtype=jnp.float32) * 0.5
    b1 = jax.random.normal(k2, (Cr,), dtype=jnp.float32) * 0.1
    w2 = jax.random.normal(k3, (C, Cr), dtype=jnp.float32) * 0.5
    b2 = jax.random.normal(k4, (C,), dtype=jnp.float32) * 0.1

    def ref_fn(xx):
        pooled = jnp.mean(xx, axis=(2, 3))                    # (n, C)
        z1 = jax.nn.relu(pooled @ w1.T + b1)                  # (n, Cr)
        z2 = z1 @ w2.T + b2                                    # (n, C)
        return xx * jax.nn.sigmoid(z2)[:, :, None, None]

    ref = ref_fn(x)

    # Fused fast path (default double-buffering at N=2).
    out_fused = cse_forward(x, w1, b1, w2, b2)
    jax.block_until_ready(out_fused)
    assert jnp.allclose(out_fused, ref, atol=1e-4, rtol=1e-4), "fused path mismatch"

    # Tiled three-pass path.
    out_tiled = cse_forward(x, w1, b1, w2, b2, force_tiled=True)
    jax.block_until_ready(out_tiled)
    assert jnp.allclose(out_tiled, ref, atol=1e-4, rtol=1e-4), "tiled path mismatch"

    # N == 1: fused path with single-buffered slabs.
    x1 = x[:1]
    ref1 = ref_fn(x1)
    out_single = cse_forward(x1, w1, b1, w2, b2)
    jax.block_until_ready(out_single)
    assert jnp.allclose(out_single, ref1, atol=1e-4, rtol=1e-4), "single-buffer fused mismatch"

    # N == 1 tiled with a small spatial tile: exercises the split ("parallel")
    # pooling reduction.
    out_split = cse_forward(x1, w1, b1, w2, b2, force_tiled=True, max_tile_hw=128)
    jax.block_until_ready(out_split)
    assert jnp.allclose(out_split, ref1, atol=1e-4, rtol=1e-4), "split-pool tiled mismatch"

    print("KERNEL_OK")
</pallas_src>

<mosaic_0001>
module attributes {stable_mosaic.version = 11 : i64} {
  func.func @_cse_fused_kernel(%arg0: i32, %arg1: memref<1x4x256xf32, #tpu.memory_space<vmem>>, %arg2: memref<2x4xf32, #tpu.memory_space<vmem>>, %arg3: memref<2x1xf32, #tpu.memory_space<vmem>>, %arg4: memref<4x2xf32, #tpu.memory_space<vmem>>, %arg5: memref<4x1xf32, #tpu.memory_space<vmem>>, %arg6: memref<1x4x256xf32, #tpu.memory_space<vmem>>) attributes {dimension_semantics = [#tpu.dimension_semantics<parallel>], iteration_bounds = array<i64: 2>, scalar_prefetch = 0 : i64, scratch_operands = 0 : i64, tpu.core_type = #tpu.core_type<tc>, window_params = [{transform_indices = @transform_0, window_bounds = array<i64: 1, 4, 256>}, {pipeline_mode = #tpu.pipeline_mode<synchronous>, transform_indices = @transform_1, window_bounds = array<i64: 2, 4>}, {pipeline_mode = #tpu.pipeline_mode<synchronous>, transform_indices = @transform_2, window_bounds = array<i64: 2, 1>}, {pipeline_mode = #tpu.pipeline_mode<synchronous>, transform_indices = @transform_3, window_bounds = array<i64: 4, 2>}, {pipeline_mode = #tpu.pipeline_mode<synchronous>, transform_indices = @transform_4, window_bounds = array<i64: 4, 1>}, {transform_indices = @transform_5, window_bounds = array<i64: 1, 4, 256>}]} {
    %c0 = arith.constant 0 : index
    %c0_0 = arith.constant 0 : index
    %c0_1 = arith.constant 0 : index
    %0 = vector.load %arg1[%c0, %c0_0, %c0_1] : memref<1x4x256xf32, #tpu.memory_space<vmem>>, vector<1x4x256xf32>
    %1 = vector.shape_cast %0 : vector<1x4x256xf32> to vector<4x256xf32>
    %cst = arith.constant 1.000000e+00 : f32
    %2 = vector.broadcast %cst : f32 to vector<256x1xf32>
    %cst_2 = arith.constant dense<0.000000e+00> : vector<4x1xf32>
    %3 = tpu.matmul %1, %2, %cst_2 {dimension_numbers = #tpu.dot_dimension_numbers<[1], [0], [0], [1], [0, 0, 1, 1], [], []>} : vector<4x256xf32>, vector<256x1xf32>, vector<4x1xf32> -> vector<4x1xf32>
    %cst_3 = arith.constant 3.906250e-03 : f32
    %4 = vector.broadcast %cst_3 : f32 to vector<4x1xf32>
    %5 = arith.mulf %3, %4 : vector<4x1xf32>
    %c0_4 = arith.constant 0 : index
    %c0_5 = arith.constant 0 : index
    %6 = vector.load %arg2[%c0_4, %c0_5] : memref<2x4xf32, #tpu.memory_space<vmem>>, vector<2x4xf32>
    %cst_6 = arith.constant dense<0.000000e+00> : vector<2x1xf32>
    %7 = tpu.matmul %6, %5, %cst_6 {dimension_numbers = #tpu.dot_dimension_numbers<[1], [0], [0], [1], [0, 0, 1, 1], [], []>} : vector<2x4xf32>, vector<4x1xf32>, vector<2x1xf32> -> vector<2x1xf32>
    %c0_7 = arith.constant 0 : index
    %c0_8 = arith.constant 0 : index
    %8 = vector.load %arg3[%c0_7, %c0_8] : memref<2x1xf32, #tpu.memory_space<vmem>>, vector<2x1xf32>
    %9 = arith.addf %7, %8 : vector<2x1xf32>
    %cst_9 = arith.constant 0.000000e+00 : f32
    %10 = vector.broadcast %cst_9 : f32 to vector<2x1xf32>
    %11 = arith.maximumf %9, %10 : vector<2x1xf32>
    %c0_10 = arith.constant 0 : index
    %c0_11 = arith.constant 0 : index
    %12 = vector.load %arg4[%c0_10, %c0_11] : memref<4x2xf32, #tpu.memory_space<vmem>>, vector<4x2xf32>
    %cst_12 = arith.constant dense<0.000000e+00> : vector<4x1xf32>
    %13 = tpu.matmul %12, %11, %cst_12 {dimension_numbers = #tpu.dot_dimension_numbers<[1], [0], [0], [1], [0, 0, 1, 1], [], []>} : vector<4x2xf32>, vector<2x1xf32>, vector<4x1xf32> -> vector<4x1xf32>
    %c0_13 = arith.constant 0 : index
    %c0_14 = arith.constant 0 : index
    %14 = vector.load %arg5[%c0_13, %c0_14] : memref<4x1xf32, #tpu.memory_space<vmem>>, vector<4x1xf32>
    %15 = arith.addf %13, %14 : vector<4x1xf32>
    %16 = arith.negf %15 : vector<4x1xf32>
    %17 = math.exp %16 : vector<4x1xf32>
    %cst_15 = arith.constant 1.000000e+00 : f32
    %18 = vector.broadcast %cst_15 : f32 to vector<4x1xf32>
    %19 = arith.addf %18, %17 : vector<4x1xf32>
    %20 = arith.divf %18, %19 : vector<4x1xf32>
    %21 = vector.broadcast %20 : vector<4x1xf32> to vector<4x256xf32>
    %22 = arith.mulf %1, %21 : vector<4x256xf32>
    %c0_16 = arith.constant 0 : index
    %c0_17 = arith.constant 0 : index
    %c0_18 = arith.constant 0 : index
    %23 = vector.load %arg6[%c0_16, %c0_17, %c0_18] : memref<1x4x256xf32, #tpu.memory_space<vmem>>, vector<1x4x256xf32>
    %24 = vector.shape_cast %23 : vector<1x4x256xf32> to vector<4x256xf32>
    %25 = vector.shape_cast %22 : vector<4x256xf32> to vector<1x4x256xf32>
    tpu.vector_store %arg6[%c0_16, %c0_17, %c0_18], %25 {strides = array<i32>} : memref<1x4x256xf32, #tpu.memory_space<vmem>>, vector<1x4x256xf32>,
    return
  }
  func.func @transform_0(%arg0: i32) -> (i32, i32, i32) {
    %c0_i32 = arith.constant 0 : i32
    %c0_i32_0 = arith.constant 0 : i32
    %c0_i32_1 = arith.constant 0 : i32
    return %arg0, %c0_i32, %c0_i32_0 : i32, i32, i32
  }
  func.func @transform_1(%arg0: i32) -> (i32, i32) {
    %c0_i32 = arith.constant 0 : i32
    %c0_i32_0 = arith.constant 0 : i32
    %c0_i32_1 = arith.constant 0 : i32
    return %c0_i32, %c0_i32_0 : i32, i32
  }
  func.func @transform_2(%arg0: i32) -> (i32, i32) {
    %c0_i32 = arith.constant 0 : i32
    %c0_i32_0 = arith.constant 0 : i32
    %c0_i32_1 = arith.constant 0 : i32
    return %c0_i32, %c0_i32_0 : i32, i32
  }
  func.func @transform_3(%arg0: i32) -> (i32, i32) {
    %c0_i32 = arith.constant 0 : i32
    %c0_i32_0 = arith.constant 0 : i32
    %c0_i32_1 = arith.constant 0 : i32
    return %c0_i32, %c0_i32_0 : i32, i32
  }
  func.func @transform_4(%arg0: i32) -> (i32, i32) {
    %c0_i32 = arith.constant 0 : i32
    %c0_i32_0 = arith.constant 0 : i32
    %c0_i32_1 = arith.constant 0 : i32
    return %c0_i32, %c0_i32_0 : i32, i32
  }
  func.func @transform_5(%arg0: i32) -> (i32, i32, i32) {
    %c0_i32 = arith.constant 0 : i32
    %c0_i32_0 = arith.constant 0 : i32
    %c0_i32_1 = arith.constant 0 : i32
    return %arg0, %c0_i32, %c0_i32_0 : i32, i32, i32
  }
}

module attributes {stable_mosaic.version = 11 : i64} {
  func.func @_cse_fused_kernel(%arg0: i32, %arg1: memref<1x4x256xf32, #tpu.memory_space<vmem>>, %arg2: memref<2x4xf32, #tpu.memory_space<vmem>>, %arg3: memref<2x1xf32, #tpu.memory_space<vmem>>, %arg4: memref<4x2xf32, #tpu.memory_space<vmem>>, %arg5: memref<4x1xf32, #tpu.memory_space<vmem>>, %arg6: memref<1x4x256xf32, #tpu.memory_space<vmem>>) attributes {dimension_semantics = [#tpu.dimension_semantics<parallel>], iteration_bounds = array<i64: 2>, scalar_prefetch = 0 : i64, scratch_operands = 0 : i64, tpu.core_type = #tpu.core_type<tc>, window_params = [{transform_indices = @transform_0, window_bounds = array<i64: 1, 4, 256>}, {pipeline_mode = #tpu.pipeline_mode<synchronous>, transform_indices = @transform_1, window_bounds = array<i64: 2, 4>}, {pipeline_mode = #tpu.pipeline_mode<synchronous>, transform_indices = @transform_2, window_bounds = array<i64: 2, 1>}, {pipeline_mode = #tpu.pipeline_mode<synchronous>, transform_indices = @transform_3, window_bounds = array<i64: 4, 2>}, {pipeline_mode = #tpu.pipeline_mode<synchronous>, transform_indices = @transform_4, window_bounds = array<i64: 4, 1>}, {transform_indices = @transform_5, window_bounds = array<i64: 1, 4, 256>}]} {
    %c0 = arith.constant 0 : index
    %c0_0 = arith.constant 0 : index
    %c0_1 = arith.constant 0 : index
    %0 = vector.load %arg1[%c0, %c0_0, %c0_1] : memref<1x4x256xf32, #tpu.memory_space<vmem>>, vector<1x4x256xf32>
    %1 = vector.shape_cast %0 : vector<1x4x256xf32> to vector<4x256xf32>
    %cst = arith.constant 1.000000e+00 : f32
    %2 = vector.broadcast %cst : f32 to vector<256x1xf32>
    %cst_2 = arith.constant dense<0.000000e+00> : vector<4x1xf32>
    %3 = tpu.matmul %1, %2, %cst_2 {dimension_numbers = #tpu.dot_dimension_numbers<[1], [0], [0], [1], [0, 0, 1, 1], [], []>} : vector<4x256xf32>, vector<256x1xf32>, vector<4x1xf32> -> vector<4x1xf32>
    %cst_3 = arith.constant 3.906250e-03 : f32
    %4 = vector.broadcast %cst_3 : f32 to vector<4x1xf32>
    %5 = arith.mulf %3, %4 : vector<4x1xf32>
    %c0_4 = arith.constant 0 : index
    %c0_5 = arith.constant 0 : index
    %6 = vector.load %arg2[%c0_4, %c0_5] : memref<2x4xf32, #tpu.memory_space<vmem>>, vector<2x4xf32>
    %cst_6 = arith.constant dense<0.000000e+00> : vector<2x1xf32>
    %7 = tpu.matmul %6, %5, %cst_6 {dimension_numbers = #tpu.dot_dimension_numbers<[1], [0], [0], [1], [0, 0, 1, 1], [], []>} : vector<2x4xf32>, vector<4x1xf32>, vector<2x1xf32> -> vector<2x1xf32>
    %c0_7 = arith.constant 0 : index
    %c0_8 = arith.constant 0 : index
    %8 = vector.load %arg3[%c0_7, %c0_8] : memref<2x1xf32, #tpu.memory_space<vmem>>, vector<2x1xf32>
    %9 = arith.addf %7, %8 : vector<2x1xf32>
    %cst_9 = arith.constant 0.000000e+00 : f32
    %10 = vector.broadcast %cst_9 : f32 to vector<2x1xf32>
    %11 = arith.maximumf %9, %10 : vector<2x1xf32>
    %c0_10 = arith.constant 0 : index
    %c0_11 = arith.constant 0 : index
    %12 = vector.load %arg4[%c0_10, %c0_11] : memref<4x2xf32, #tpu.memory_space<vmem>>, vector<4x2xf32>
    %cst_12 = arith.constant dense<0.000000e+00> : vector<4x1xf32>
    %13 = tpu.matmul %12, %11, %cst_12 {dimension_numbers = #tpu.dot_dimension_numbers<[1], [0], [0], [1], [0, 0, 1, 1], [], []>} : vector<4x2xf32>, vector<2x1xf32>, vector<4x1xf32> -> vector<4x1xf32>
    %c0_13 = arith.constant 0 : index
    %c0_14 = arith.constant 0 : index
    %14 = vector.load %arg5[%c0_13, %c0_14] : memref<4x1xf32, #tpu.memory_space<vmem>>, vector<4x1xf32>
    %15 = arith.addf %13, %14 : vector<4x1xf32>
    %16 = arith.negf %15 : vector<4x1xf32>
    %17 = math.exp %16 : vector<4x1xf32>
    %cst_15 = arith.constant 1.000000e+00 : f32
    %18 = vector.broadcast %cst_15 : f32 to vector<4x1xf32>
    %19 = arith.addf %18, %17 : vector<4x1xf32>
    %20 = arith.divf %18, %19 : vector<4x1xf32>
    %21 = vector.broadcast %20 : vector<4x1xf32> to vector<4x256xf32>
    %22 = arith.mulf %1, %21 : vector<4x256xf32>
    %c0_16 = arith.constant 0 : index
    %c0_17 = arith.constant 0 : index
    %c0_18 = arith.constant 0 : index
    %23 = vector.load %arg6[%c0_16, %c0_17, %c0_18] : memref<1x4x256xf32, #tpu.memory_space<vmem>>, vector<1x4x256xf32>
    %24 = vector.shape_cast %23 : vector<1x4x256xf32> to vector<4x256xf32>
    %25 = vector.shape_cast %22 : vector<4x256xf32> to vector<1x4x256xf32>
    tpu.vector_store %arg6[%c0_16, %c0_17, %c0_18], %25 {strides = array<i32>} : memref<1x4x256xf32, #tpu.memory_space<vmem>>, vector<1x4x256xf32>,
    return
  }
  func.func @transform_0(%arg0: i32) -> (i32, i32, i32) {
    %c0_i32 = arith.constant 0 : i32
    %c0_i32_0 = arith.constant 0 : i32
    %c0_i32_1 = arith.constant 0 : i32
    return %arg0, %c0_i32, %c0_i32_0 : i32, i32, i32
  }
  func.func @transform_1(%arg0: i32) -> (i32, i32) {
    %c0_i32 = arith.constant 0 : i32
    %c0_i32_0 = arith.constant 0 : i32
    %c0_i32_1 = arith.constant 0 : i32
    return %c0_i32, %c0_i32_0 : i32, i32
  }
  func.func @transform_2(%arg0: i32) -> (i32, i32) {
    %c0_i32 = arith.constant 0 : i32
    %c0_i32_0 = arith.constant 0 : i32
    %c0_i32_1 = arith.constant 0 : i32
    return %c0_i32, %c0_i32_0 : i32, i32
  }
  func.func @transform_3(%arg0: i32) -> (i32, i32) {
    %c0_i32 = arith.constant 0 : i32
    %c0_i32_0 = arith.constant 0 : i32
    %c0_i32_1 = arith.constant 0 : i32
    return %c0_i32, %c0_i32_0 : i32, i32
  }
  func.func @transform_4(%arg0: i32) -> (i32, i32) {
    %c0_i32 = arith.constant 0 : i32
    %c0_i32_0 = arith.constant 0 : i32
    %c0_i32_1 = arith.constant 0 : i32
    return %c0_i32, %c0_i32_0 : i32, i32
  }
  func.func @transform_5(%arg0: i32) -> (i32, i32, i32) {
    %c0_i32 = arith.constant 0 : i32
    %c0_i32_0 = arith.constant 0 : i32
    %c0_i32_1 = arith.constant 0 : i32
    return %arg0, %c0_i32, %c0_i32_0 : i32, i32, i32
  }
}

</mosaic_0001>

<llo_original>
// kernel: tpu_custom_call.1
$region0: #{tpu_custom_call.1}
  #allocation0 [shape = 'u32[]', space=smem, size = 0x4, offset = 0x4, fixed_abs, tag = 'smem constant byte address 0x4 - core index']
  #allocation1 [shape = 'u32[144,128]{1,0:T(1,128)}', space=vmem, size = 0x12000, scoped, tag = 'internal scratch']
  %s0 = inlined_call_operand.hbm [shape: f32[2,4,256], index: 0, kind: input, shape index: {}]
  %s1 = inlined_call_operand.vmem [shape: f32[2,4], index: 1, kind: input, shape index: {}]
  %s2 = inlined_call_operand.vmem [shape: f32[2,1], index: 2, kind: input, shape index: {}]
  %s3 = inlined_call_operand.vmem [shape: f32[4,2], index: 3, kind: input, shape index: {}]
  %s4 = inlined_call_operand.vmem [shape: f32[4,1], index: 4, kind: input, shape index: {}]
  %s5 = inlined_call_operand.hbm [shape: f32[2,4,256], index: 5, kind: output, shape index: {}]
  %s6 = sld [smem:[#allocation0]]
  $region57: #{tpu_custom_call.1} parent=0
    _
  %s8 = ssub.s32 1, %s6
  %s9 = scalar_select 0, %s8, %s6
  $region1: #{tpu_custom_call.1} parent=0
    #allocation2 [shape = 'u8[8192]{0}', space=vmem, size = 0x2000, scoped, tag = 'input window, operand 0']
    #allocation3 [shape = 's32[2]{0}', space=sflag, size = 0x8, scoped, tag = 'scoped memory for tpu_custom_call.1']
    #allocation4 [shape = 's32[2]{0}', space=sflag, size = 0x8, scoped, tag = 'scoped memory for tpu_custom_call.1']
    #allocation5 [shape = 'u8[8192]{0}', space=vmem, size = 0x2000, scoped, tag = 'output window, operand 0']
    %10 = vsyncpa [#allocation3], 0
    %s11 = scalar_lea.sflag [#allocation3], 1
    %12 = vsyncpa %s11, 0
    %13 = vsyncpa [#allocation4], 0
    %s14 = scalar_lea.sflag [#allocation4], 1
    %15 = vsyncpa %s14, 0
    loop: start=0, step=1, limit=4
    $region2: #{tpu_custom_call.1} parent=1 // loop_pre_header
      _
    $region3: #{tpu_custom_call.1} parent=1 // loop_header
      %s17 = sphi 0, %s21
      %p18 = scmp.ge.s32.totalorder %s17, 4
      %s27 = sphi 0, %s29
      %s30 = sphi 0, %s27
      %s31 = sphi 0, %s30
      %s47 = sphi 0, %s31
      %s51 = sphi 0, %s51
      %s53 = sphi 0, %s51
      %s54 = sphi 0, %s53
      %s68 = sphi 0, %s54
      %s72 = sphi 0, %s72
      %s74 = sphi 0, %s72
      %s75 = sphi 0, %s74
      %s89 = sphi 0, %s75
      %s93 = sphi 0, %s93
      %s95 = sphi 0, %s93
      %s96 = sphi 0, %s95
      %s110 = sphi 0, %s96
      %s114 = sphi 0, %s114
      %s116 = sphi 0, %s114
      %s117 = sphi 0, %s116
      %s131 = sphi 0, %s117
      %s137 = sphi 0, %s139
      %s140 = sphi 0, %s137
      %s141 = sphi 0, %s140
      %s157 = sphi 0, %s141
    $region4: #{tpu_custom_call.1} parent=1 // loop_header_branch
      %20 = sbr.rel (%p18) target = $region8
    $region5: #{tpu_custom_call.1} parent=1 // loop_body
      %s22 = ssub.s32 %s17, 1
      %s23 = ssub.s32 %s17, 2
      %s24 = sadd.s32 %s17, 1
      %s25 = ssub.s32 %s17, %s24
      %p26 = scmp.eq.s32.totalorder %s25, 0
      %s28 = sadd.s32 %s27, 1
      %s29 = scalar_select %p26, %s27, %s28
      %p32 = pneg %p26
      %p33 = scmp.eq.s32.totalorder %s17, 1
      %p34 = por %p32, %p33
      %p35 = scmp.ne.s32.totalorder %s27, %s30
      %p36 = scmp.eq.s32.totalorder %s17, 0
      %p37 = por %p35, %p36
      %p38 = scmp.ne.s32.totalorder %s27, %s30
      %p39 = scmp.eq.s32.totalorder %s22, 1
      %p40 = por %p38, %p39
      %p41 = scmp.ne.s32.totalorder %s30, %s31
      %p42 = scmp.eq.s32.totalorder %s22, 0
      %p43 = por %p41, %p42
      %p44 = scmp.ne.s32.totalorder %s30, %s31
      %p45 = scmp.eq.s32.totalorder %s23, 1
      %p46 = por %p44, %p45
      %p48 = scmp.ne.s32.totalorder %s31, %s47
      %p49 = scmp.eq.s32.totalorder %s23, 0
      %p50 = por %p48, %p49
      %s52 = sadd.s32 %s51, 1
      %p55 = scmp.eq.s32.totalorder %s17, 1
      %p56 = scmp.ne.s32.totalorder %s51, %s53
      %p57 = scmp.eq.s32.totalorder %s17, 0
      %p58 = por %p56, %p57
      %p59 = scmp.ne.s32.totalorder %s51, %s53
      %p60 = scmp.eq.s32.totalorder %s22, 1
      %p61 = por %p59, %p60
      %p62 = scmp.ne.s32.totalorder %s53, %s54
      %p63 = scmp.eq.s32.totalorder %s22, 0
      %p64 = por %p62, %p63
      %p65 = scmp.ne.s32.totalorder %s53, %s54
      %p66 = scmp.eq.s32.totalorder %s23, 1
      %p67 = por %p65, %p66
      %p69 = scmp.ne.s32.totalorder %s54, %s68
      %p70 = scmp.eq.s32.totalorder %s23, 0
      %p71 = por %p69, %p70
      %s73 = sadd.s32 %s72, 1
      %p76 = scmp.eq.s32.totalorder %s17, 1
      %p77 = scmp.ne.s32.totalorder %s72, %s74
      %p78 = scmp.eq.s32.totalorder %s17, 0
      %p79 = por %p77, %p78
      %p80 = scmp.ne.s32.totalorder %s72, %s74
      %p81 = scmp.eq.s32.totalorder %s22, 1
      %p82 = por %p80, %p81
      %p83 = scmp.ne.s32.totalorder %s74, %s75
      %p84 = scmp.eq.s32.totalorder %s22, 0
      %p85 = por %p83, %p84
      %p86 = scmp.ne.s32.totalorder %s74, %s75
      %p87 = scmp.eq.s32.totalorder %s23, 1
      %p88 = por %p86, %p87
      %p90 = scmp.ne.s32.totalorder %s75, %s89
      %p91 = scmp.eq.s32.totalorder %s23, 0
      %p92 = por %p90, %p91
      %s94 = sadd.s32 %s93, 1
      %p97 = scmp.eq.s32.totalorder %s17, 1
      %p98 = scmp.ne.s32.totalorder %s93, %s95
      %p99 = scmp.eq.s32.totalorder %s17, 0
      %p100 = por %p98, %p99
      %p101 = scmp.ne.s32.totalorder %s93, %s95
      %p102 = scmp.eq.s32.totalorder %s22, 1
      %p103 = por %p101, %p102
      %p104 = scmp.ne.s32.totalorder %s95, %s96
      %p105 = scmp.eq.s32.totalorder %s22, 0
      %p106 = por %p104, %p105
      %p107 = scmp.ne.s32.totalorder %s95, %s96
      %p108 = scmp.eq.s32.totalorder %s23, 1
      %p109 = por %p107, %p108
      %p111 = scmp.ne.s32.totalorder %s96, %s110
      %p112 = scmp.eq.s32.totalorder %s23, 0
      %p113 = por %p111, %p112
      %s115 = sadd.s32 %s114, 1
      %p118 = scmp.eq.s32.totalorder %s17, 1
      %p119 = scmp.ne.s32.totalorder %s114, %s116
      %p120 = scmp.eq.s32.totalorder %s17, 0
      %p121 = por %p119, %p120
      %p122 = scmp.ne.s32.totalorder %s114, %s116
      %p123 = scmp.eq.s32.totalorder %s22, 1
      %p124 = por %p122, %p123
      %p125 = scmp.ne.s32.totalorder %s116, %s117
      %p126 = scmp.eq.s32.totalorder %s22, 0
      %p127 = por %p125, %p126
      %p128 = scmp.ne.s32.totalorder %s116, %s117
      %p129 = scmp.eq.s32.totalorder %s23, 1
      %p130 = por %p128, %p129
      %p132 = scmp.ne.s32.totalorder %s117, %s131
      %p133 = scmp.eq.s32.totalorder %s23, 0
      %p134 = por %p132, %p133
      %s135 = ssub.s32 %s17, %s24
      %p136 = scmp.eq.s32.totalorder %s135, 0
      %s138 = sadd.s32 %s137, 1
      %s139 = scalar_select %p136, %s137, %s138
      %p142 = pneg %p136
      %p143 = scmp.eq.s32.totalorder %s17, 1
      %p144 = por %p142, %p143
      %p145 = scmp.ne.s32.totalorder %s137, %s140
      %p146 = scmp.eq.s32.totalorder %s17, 0
      %p147 = por %p145, %p146
      %p148 = scmp.ne.s32.totalorder %s137, %s140
      %p149 = scmp.eq.s32.totalorder %s22, 1
      %p150 = por %p148, %p149
      %p151 = scmp.ne.s32.totalorder %s140, %s141
      %p152 = scmp.eq.s32.totalorder %s22, 0
      %p153 = por %p151, %p152
      %p154 = scmp.ne.s32.totalorder %s140, %s141
      %p155 = scmp.eq.s32.totalorder %s23, 1
      %p156 = por %p154, %p155
      %p158 = scmp.ne.s32.totalorder %s141, %s157
      %p159 = scmp.eq.s32.totalorder %s23, 0
      %p160 = por %p158, %p159
      %p161 = scmp.le.s32.totalorder 1, %s17
      %p162 = scmp.lt.s32.totalorder %s17, 3
      %p163 = pnand %p161, %p162
      %p164 = pneg %p163
      // Predicated region
      $region9: #{tpu_custom_call.1} parent=5 // pred_check
        _
      $region10: #{tpu_custom_call.1} parent=5 // pred_check_branch
        %166 = sbr.rel (%p163) target = $region12
      $region11: #{tpu_custom_call.1} parent=5 // pred_region
        %s167 = ssub.s32 %s17, 1
        // Predicated region
        $region13: #{tpu_custom_call.1} parent=11 // pred_check
          %p168 = pneg %p64
        $region14: #{tpu_custom_call.1} parent=11 // pred_check_branch
          %170 = sbr.rel (%p168) target = $region16
        $region15: #{tpu_custom_call.1} parent=11 // pred_region
          _
        $region16: #{tpu_custom_call.1} parent=11 // pred_fallthru
          _
        // Predicated region
        $region17: #{tpu_custom_call.1} parent=11 // pred_check
          %p171 = pneg %p85
        $region18: #{tpu_custom_call.1} parent=11 // pred_check_branch
          %173 = sbr.rel (%p171) target = $region20
        $region19: #{tpu_custom_call.1} parent=11 // pred_region
          _
        $region20: #{tpu_custom_call.1} parent=11 // pred_fallthru
          _
        // Predicated region
        $region21: #{tpu_custom_call.1} parent=11 // pred_check
          %p174 = pneg %p106
        $region22: #{tpu_custom_call.1} parent=11 // pred_check_branch
          %176 = sbr.rel (%p174) target = $region24
        $region23: #{tpu_custom_call.1} parent=11 // pred_region
          _
        $region24: #{tpu_custom_call.1} parent=11 // pred_fallthru
          _
        // Predicated region
        $region25: #{tpu_custom_call.1} parent=11 // pred_check
          %p177 = pneg %p127
        $region26: #{tpu_custom_call.1} parent=11 // pred_check_branch
          %179 = sbr.rel (%p177) target = $region28
        $region27: #{tpu_custom_call.1} parent=11 // pred_region
          _
        $region28: #{tpu_custom_call.1} parent=11 // pred_fallthru
          _
      $region12: #{tpu_custom_call.1} parent=5 // pred_fallthru
        _
      %p180 = scmp.lt.s32.totalorder %s17, 2
      // Predicated region
      $region29: #{tpu_custom_call.1} parent=5 // pred_check
        %p181 = pneg %p180
      $region30: #{tpu_custom_call.1} parent=5 // pred_check_branch
        %183 = sbr.rel (%p181) target = $region32
      $region31: #{tpu_custom_call.1} parent=5 // pred_region
        // Predicated region
        $region33: #{tpu_custom_call.1} parent=31 // pred_check
          %p184 = pneg %p37
        $region34: #{tpu_custom_call.1} parent=31 // pred_check_branch
          %186 = sbr.rel (%p184) target = $region36
        $region35: #{tpu_custom_call.1} parent=31 // pred_region
          %s187 = sand.u32 %s27, 1
          %s188 = scalar_lea.sflag [#allocation3], %s187
          %s189 = sand.u32 %s27, 1
          %s190 = smul.addr %s189, 8
          %s191 = scalar_lea.vmem [#allocation2], %s190
          %s193 = ssub.s32 128, 128
          %194 = vsyncadd %s188, %s193
          %s195 = smul.addr %s17, 2
          %s196 = smul.addr %s195, 64
          %s197 = scalar_lea.hbm %s0, %s196
          %s199 = sshll.u32 %s191, 4
          %s200 = int_to_ptr.vmem [resolvable:$true] %s199
          %202 = dma.hbm_to_vmem [thread:$0]  %s197, 128, %s200, %s188
        $region36: #{tpu_custom_call.1} parent=31 // pred_fallthru
          _
      $region32: #{tpu_custom_call.1} parent=5 // pred_fallthru
        _
      %p203 = scmp.le.s32.totalorder 1, %s17
      %p204 = scmp.lt.s32.totalorder %s17, 3
      %p205 = pnand %p203, %p204
      %p206 = pneg %p205
      // Predicated region
      $region37: #{tpu_custom_call.1} parent=5 // pred_check
        _
      $region38: #{tpu_custom_call.1} parent=5 // pred_check_branch
        %208 = sbr.rel (%p205) target = $region40
      $region39: #{tpu_custom_call.1} parent=5 // pred_region
        %s209 = ssub.s32 %s17, 1
        %s210 = sand.u32 %s30, 1
        %s211 = scalar_lea.sflag [#allocation3], %s210
        %s212 = sand.u32 %s30, 1
        %s213 = smul.addr %s212, 8
        %s214 = scalar_lea.vmem [#allocation2], %s213
        // Predicated region
        $region41: #{tpu_custom_call.1} parent=39 // pred_check
          %p215 = pneg %p43
        $region42: #{tpu_custom_call.1} parent=39 // pred_check_branch
          %217 = sbr.rel (%p215) target = $region44
        $region43: #{tpu_custom_call.1} parent=39 // pred_region
          %218 = dma.done %s211, 128
        $region44: #{tpu_custom_call.1} parent=39 // pred_fallthru
          _
        %s219 = sand.u32 %s30, 1
        %s220 = scalar_lea.sflag [#allocation3], %s219
        %s221 = sand.u32 %s30, 1
        %s222 = smul.addr %s221, 8
        %s223 = scalar_lea.vmem [#allocation2], %s222
        %p224 = pneg %p43
        %p225 = pneg %p40
        %p226 = pneg %p64
        %p227 = pneg %p61
        %p228 = pneg %p85
        %p229 = pneg %p82
        %p230 = pneg %p106
        %p231 = pneg %p103
        %p232 = pneg %p127
        %p233 = pneg %p124
        %p234 = pneg %p153
        %p235 = pneg %p150
        %s236 = sand.u32 %s140, 1
        %s237 = scalar_lea.sflag [#allocation4], %s236
        %s238 = sand.u32 %s140, 1
        %s239 = smul.addr %s238, 8
        %s240 = scalar_lea.vmem [#allocation5], %s239
        %v241 = vld [vmem:[%s214] sm:$0xff]
        %v243 = vcombine.high %v241, %v241
        %245 = vmatprep.subr.mxu0 0.0
        %246 = vmatpush1.msra.mxu0 1.0
        %247 = vmatprep.subr.mxu0 0.0
        %248 = vmatpush1.msra.mxu0 1.0
        %249 = vmatprep.subr.mxu0 0.0
        %250 = vmatpush1.msra.mxu0 1.0
        %251 = vmatprep.subr.mxu0 0.0
        %252 = vmatpush1.msra.mxu0 1.0
        %253 = vmatprep.subr.mxu0 0.0
        %254 = vmatpush1.msra.mxu0 1.0
        %255 = vmatprep.subr.mxu0 0.0
        %256 = vmatpush1.msra.mxu0 1.0
        %257 = vmatprep.subr.mxu0 0.0
        %258 = vmatpush1.msra.mxu0 1.0
        %259 = vmatprep.subr.mxu0 0.0
        %260 = vmatpush1.msra.mxu0 1.0
        %261 = vmatprep.subr.mxu0 0.0
        %262 = vmatpush1.msra.mxu0 1.0
        %263 = vmatprep.subr.mxu0 0.0
        %264 = vmatpush1.msra.mxu0 1.0
        %265 = vmatprep.subr.mxu0 0.0
        %266 = vmatpush1.msra.mxu0 1.0
        %267 = vmatprep.subr.mxu0 0.0
        %268 = vmatpush1.msra.mxu0 1.0
        %269 = vmatprep.subr.mxu0 0.0
        %270 = vmatpush1.msra.mxu0 1.0
        %271 = vmatprep.subr.mxu0 0.0
        %272 = vmatpush1.msra.mxu0 1.0
        %273 = vmatprep.subr.mxu0 0.0
        %274 = vmatpush1.msra.mxu0 1.0
        %275 = vmatprep.subr.mxu0 0.0
        %276 = vmatpush1.msra.mxu0 1.0
        %277 = vmatprep.subr.mxu0 0.0
        %278 = vmatpush1.msra.mxu0 1.0
        %279 = vmatprep.subr.mxu0 0.0
        %280 = vmatpush1.msra.mxu0 1.0
        %281 = vmatprep.subr.mxu0 0.0
        %282 = vmatpush1.msra.mxu0 1.0
        %283 = vmatprep.subr.mxu0 0.0
        %284 = vmatpush1.msra.mxu0 1.0
        %285 = vmatprep.subr.mxu0 0.0
        %286 = vmatpush1.msra.mxu0 1.0
        %287 = vmatprep.subr.mxu0 0.0
        %288 = vmatpush1.msra.mxu0 1.0
        %289 = vmatprep.subr.mxu0 0.0
        %290 = vmatpush1.msra.mxu0 1.0
        %291 = vmatprep.subr.mxu0 0.0
        %292 = vmatpush1.msra.mxu0 1.0
        %293 = vmatprep.subr.mxu0 0.0
        %294 = vmatpush1.msra.mxu0 1.0
        %295 = vmatprep.subr.mxu0 0.0
        %296 = vmatpush1.msra.mxu0 1.0
        %297 = vmatprep.subr.mxu0 0.0
        %298 = vmatpush1.msra.mxu0 1.0
        %299 = vmatprep.subr.mxu0 0.0
        %300 = vmatpush1.msra.mxu0 1.0
        %301 = vmatprep.subr.mxu0 0.0
        %302 = vmatpush1.msra.mxu0 1.0
        %303 = vmatprep.subr.mxu0 0.0
        %304 = vmatpush1.msra.mxu0 1.0
        %305 = vmatprep.subr.mxu0 0.0
        %306 = vmatpush1.msra.mxu0 1.0
        %307 = vmatprep.subr.mxu0 0.0
        %308 = vmatpush1.msra.mxu0 1.0
        %309 = vmatprep.mubr.f32.mxu0 %v243
        %310 = vmatmul.mubr.f32.gmra.mrb[0].mxu0 %v241
        %v311 = vpop.f32.mrb[0].mxu0
        %v312 = vadd.f32 0.0, %v311
        %v313 = vpop.f32.mrb[0].mxu0
        %314 = vdwg.mxu0
        %v315 = vmul.f32 %v312, 0.00390625
        %v316 = vld [vmem:[%s1] sm:$0x3]
        %v317 = vld [vmem:[%s2] sm:$0x3]
        %vm318 = vcmask 31744
        %v320 = vsel %vm318, %v316, 0
        %vm322 = vcmask 1043456
        %v324 = vsel %vm322, %v315, 0
        %326 = vmatprep.subr.mxu0 0.0
        %327 = vmatpush1.msra.mxu0 %v324
        %328 = vmatprep.subr.mxu0 0.0
        %329 = vmatpush1.msra.mxu0 0.0
        %330 = vmatprep.subr.mxu0 0.0
        %331 = vmatpush1.msra.mxu0 0.0
        %332 = vmatprep.subr.mxu0 0.0
        %333 = vmatpush1.msra.mxu0 0.0
        %334 = vmatprep.subr.mxu0 0.0
        %335 = vmatpush1.msra.mxu0 0.0
        %336 = vmatprep.subr.mxu0 0.0
        %337 = vmatpush1.msra.mxu0 0.0
        %338 = vmatprep.subr.mxu0 0.0
        %339 = vmatpush1.msra.mxu0 0.0
        %340 = vmatprep.subr.mxu0 0.0
        %341 = vmatpush1.msra.mxu0 0.0
        %342 = vmatprep.subr.mxu0 0.0
        %343 = vmatpush1.msra.mxu0 0.0
        %344 = vmatprep.subr.mxu0 0.0
        %345 = vmatpush1.msra.mxu0 0.0
        %346 = vmatprep.subr.mxu0 0.0
        %347 = vmatpush1.msra.mxu0 0.0
        %348 = vmatprep.subr.mxu0 0.0
        %349 = vmatpush1.msra.mxu0 0.0
        %350 = vmatprep.subr.mxu0 0.0
        %351 = vmatpush1.msra.mxu0 0.0
        %352 = vmatprep.subr.mxu0 0.0
        %353 = vmatpush1.msra.mxu0 0.0
        %354 = vmatprep.subr.mxu0 0.0
        %355 = vmatpush1.msra.mxu0 0.0
        %356 = vmatprep.subr.mxu0 0.0
        %357 = vmatpush1.msra.mxu0 0.0
        %358 = vmatprep.subr.mxu0 0.0
        %359 = vmatpush1.msra.mxu0 0.0
        %360 = vmatprep.subr.mxu0 0.0
        %361 = vmatpush1.msra.mxu0 0.0
        %362 = vmatprep.subr.mxu0 0.0
        %363 = vmatpush1.msra.mxu0 0.0
        %364 = vmatprep.subr.mxu0 0.0
        %365 = vmatpush1.msra.mxu0 0.0
        %366 = vmatprep.subr.mxu0 0.0
        %367 = vmatpush1.msra.mxu0 0.0
        %368 = vmatprep.subr.mxu0 0.0
        %369 = vmatpush1.msra.mxu0 0.0
        %370 = vmatprep.subr.mxu0 0.0
        %371 = vmatpush1.msra.mxu0 0.0
        %372 = vmatprep.subr.mxu0 0.0
        %373 = vmatpush1.msra.mxu0 0.0
        %374 = vmatprep.subr.mxu0 0.0
        %375 = vmatpush1.msra.mxu0 0.0
        %376 = vmatprep.subr.mxu0 0.0
        %377 = vmatpush1.msra.mxu0 0.0
        %378 = vmatprep.subr.mxu0 0.0
        %379 = vmatpush1.msra.mxu0 0.0
        %380 = vmatprep.subr.mxu0 0.0
        %381 = vmatpush1.msra.mxu0 0.0
        %382 = vmatprep.subr.mxu0 0.0
        %383 = vmatpush1.msra.mxu0 0.0
        %384 = vmatprep.subr.mxu0 0.0
        %385 = vmatpush1.msra.mxu0 0.0
        %386 = vmatprep.subr.mxu0 0.0
        %387 = vmatpush1.msra.mxu0 0.0
        %388 = vmatprep.subr.mxu0 0.0
        %389 = vmatpush1.msra.mxu0 0.0
        %390 = vmatprep.mubr.f32.mxu0 0.0
        %391 = vmatmul.mubr.f32.gmra.mrb[0].mxu0 %v320
        %v392 = vpop.f32.mrb[0].mxu0
        %v393 = vadd.f32 %v317, %v392
        %v394 = vpop.f32.mrb[0].mxu0
        %395 = vdwg.mxu0
        %v396 = vmax.f32 %v393, 0.0
        %v397 = vld [vmem:[%s3] sm:$0xf]
        %v398 = vld [vmem:[%s4] sm:$0xf]
        %vm399 = vcmask 15360
        %v401 = vsel %vm399, %v397, 0
        %vm403 = vcmask 1041408
        %v405 = vsel %vm403, %v396, 0
        %407 = vmatprep.subr.mxu0 0.0
        %408 = vmatpush1.msra.mxu0 %v405
        %409 = vmatprep.subr.mxu0 0.0
        %410 = vmatpush1.msra.mxu0 0.0
        %411 = vmatprep.subr.mxu0 0.0
        %412 = vmatpush1.msra.mxu0 0.0
        %413 = vmatprep.subr.mxu0 0.0
        %414 = vmatpush1.msra.mxu0 0.0
        %415 = vmatprep.subr.mxu0 0.0
        %416 = vmatpush1.msra.mxu0 0.0
        %417 = vmatprep.subr.mxu0 0.0
        %418 = vmatpush1.msra.mxu0 0.0
        %419 = vmatprep.subr.mxu0 0.0
        %420 = vmatpush1.msra.mxu0 0.0
        %421 = vmatprep.subr.mxu0 0.0
        %422 = vmatpush1.msra.mxu0 0.0
        %423 = vmatprep.subr.mxu0 0.0
        %424 = vmatpush1.msra.mxu0 0.0
        %425 = vmatprep.subr.mxu0 0.0
        %426 = vmatpush1.msra.mxu0 0.0
        %427 = vmatprep.subr.mxu0 0.0
        %428 = vmatpush1.msra.mxu0 0.0
        %429 = vmatprep.subr.mxu0 0.0
        %430 = vmatpush1.msra.mxu0 0.0
        %431 = vmatprep.subr.mxu0 0.0
        %432 = vmatpush1.msra.mxu0 0.0
        %433 = vmatprep.subr.mxu0 0.0
        %434 = vmatpush1.msra.mxu0 0.0
        %435 = vmatprep.subr.mxu0 0.0
        %436 = vmatpush1.msra.mxu0 0.0
        %437 = vmatprep.subr.mxu0 0.0
        %438 = vmatpush1.msra.mxu0 0.0
        %439 = vmatprep.subr.mxu0 0.0
        %440 = vmatpush1.msra.mxu0 0.0
        %441 = vmatprep.subr.mxu0 0.0
        %442 = vmatpush1.msra.mxu0 0.0
        %443 = vmatprep.subr.mxu0 0.0
        %444 = vmatpush1.msra.mxu0 0.0
        %445 = vmatprep.subr.mxu0 0.0
        %446 = vmatpush1.msra.mxu0 0.0
        %447 = vmatprep.subr.mxu0 0.0
        %448 = vmatpush1.msra.mxu0 0.0
        %449 = vmatprep.subr.mxu0 0.0
        %450 = vmatpush1.msra.mxu0 0.0
        %451 = vmatprep.subr.mxu0 0.0
        %452 = vmatpush1.msra.mxu0 0.0
        %453 = vmatprep.subr.mxu0 0.0
        %454 = vmatpush1.msra.mxu0 0.0
        %455 = vmatprep.subr.mxu0 0.0
        %456 = vmatpush1.msra.mxu0 0.0
        %457 = vmatprep.subr.mxu0 0.0
        %458 = vmatpush1.msra.mxu0 0.0
        %459 = vmatprep.subr.mxu0 0.0
        %460 = vmatpush1.msra.mxu0 0.0
        %461 = vmatprep.subr.mxu0 0.0
        %462 = vmatpush1.msra.mxu0 0.0
        %463 = vmatprep.subr.mxu0 0.0
        %464 = vmatpush1.msra.mxu0 0.0
        %465 = vmatprep.subr.mxu0 0.0
        %466 = vmatpush1.msra.mxu0 0.0
        %467 = vmatprep.subr.mxu0 0.0
        %468 = vmatpush1.msra.mxu0 0.0
        %469 = vmatprep.subr.mxu0 0.0
        %470 = vmatpush1.msra.mxu0 0.0
        %471 = vmatprep.mubr.f32.mxu0 0.0
        %472 = vmatmul.mubr.f32.gmra.mrb[0].mxu0 %v401
        %v473 = vpop.f32.mrb[0].mxu0
        %v474 = vadd.f32 %v398, %v473
        %v475 = vpop.f32.mrb[0].mxu0
        %476 = vdwg.mxu0
        %v477 = vxor.u32 %v474, 2147483648
        %v478 = vmul.f32 %v477, 1.442695
        %v479 = vpow.pop %v478
        %v480 = vadd.f32 %v479, 1.0
        %v481 = vrcp.pop %v480
        %v482 = vmul.f32 1.0, %v481
        %484 = vset.pattern.permute.xlu0 0
        %485 = vperm.xlu0 %484, %v482
        %v486 = vpop.permute.xlu0 %485
        %v488 = vunpack.c.l.s4 839922192
        %v489 = vunpack.c.0.s8 %v488
        %v490 = vlaneseq
        %v491 = vshrl.u32 %v490, 7
        %v492 = vsub.s32 %v489, %v491
        %v493 = vrot.slane %v486, %v492
        %v495 = vmul.f32 %v241, %v493
        %496 = vst [vmem:[%s240] sm:$0xff] %v495
        %s497 = sand.u32 %s140, 1
        %s498 = scalar_lea.sflag [#allocation4], %s497
        %s499 = sand.u32 %s140, 1
        %s500 = smul.addr %s499, 8
        %s501 = scalar_lea.vmem [#allocation5], %s500
        // Predicated region
        $region45: #{tpu_custom_call.1} parent=39 // pred_check
          %p502 = pneg %p150
        $region46: #{tpu_custom_call.1} parent=39 // pred_check_branch
          %504 = sbr.rel (%p502) target = $region48
        $region47: #{tpu_custom_call.1} parent=39 // pred_region
          %s506 = ssub.s32 128, 128
          %507 = vsyncadd %s498, %s506
          %s508 = smul.addr %s22, 2
          %s509 = smul.addr %s508, 64
          %s510 = scalar_lea.hbm %s5, %s509
          %s512 = sshll.u32 %s501, 4
          %s513 = int_to_ptr.vmem [resolvable:$true] %s512
          %515 = dma.vmem_to_hbm [thread:$0]  %s513, 128, %s510, %s498
        $region48: #{tpu_custom_call.1} parent=39 // pred_fallthru
          _
      $region40: #{tpu_custom_call.1} parent=5 // pred_fallthru
        _
      %p516 = scmp.le.s32.totalorder 2, %s17
      // Predicated region
      $region49: #{tpu_custom_call.1} parent=5 // pred_check
        %p517 = pneg %p516
      $region50: #{tpu_custom_call.1} parent=5 // pred_check_branch
        %519 = sbr.rel (%p517) target = $region52
      $region51: #{tpu_custom_call.1} parent=5 // pred_region
        %s520 = ssub.s32 %s17, 2
        // Predicated region
        $region53: #{tpu_custom_call.1} parent=51 // pred_check
          %p521 = pneg %p156
        $region54: #{tpu_custom_call.1} parent=51 // pred_check_branch
          %523 = sbr.rel (%p521) target = $region56
        $region55: #{tpu_custom_call.1} parent=51 // pred_region
          %s524 = sand.u32 %s141, 1
          %s525 = scalar_lea.sflag [#allocation4], %s524
          %s526 = sand.u32 %s141, 1
          %s527 = smul.addr %s526, 8
          %s528 = scalar_lea.vmem [#allocation5], %s527
          %529 = dma.done %s525, 128
        $region56: #{tpu_custom_call.1} parent=51 // pred_fallthru
          _
      $region52: #{tpu_custom_call.1} parent=5 // pred_fallthru
        _
    $region6: #{tpu_custom_call.1} parent=1 // loop_footer
      %s21 = sadd.s32 1, %s17
    $region7: #{tpu_custom_call.1} parent=1 // loop_footer_branch
      %16 = sbr.rel target = $region3
    $region8: #{tpu_custom_call.1} parent=1 // loop_exit
      _
    %530 = vsyncpa [#allocation3], 1
    %s531 = scalar_lea.sflag [#allocation3], 1
    %532 = vsyncpa %s531, 1
    %533 = vsyncpa [#allocation4], 1
    %s534 = scalar_lea.sflag [#allocation4], 1
    %535 = vsyncpa %s534, 1

// kernel: tpu_custom_call.1
$region0: #{tpu_custom_call.1}
  #allocation0 [shape = 'u32[]', space=smem, size = 0x4, offset = 0x4, fixed_abs, tag = 'smem constant byte address 0x4 - core index']
  #allocation1 [shape = 'u32[144,128]{1,0:T(1,128)}', space=vmem, size = 0x12000, scoped, tag = 'internal scratch']
  %s0 = inlined_call_operand.hbm [shape: f32[2,4,256], index: 0, kind: input, shape index: {}]
  %s1 = inlined_call_operand.vmem [shape: f32[2,4], index: 1, kind: input, shape index: {}]
  %s2 = inlined_call_operand.vmem [shape: f32[2,1], index: 2, kind: input, shape index: {}]
  %s3 = inlined_call_operand.vmem [shape: f32[4,2], index: 3, kind: input, shape index: {}]
  %s4 = inlined_call_operand.vmem [shape: f32[4,1], index: 4, kind: input, shape index: {}]
  %s5 = inlined_call_operand.hbm [shape: f32[2,4,256], index: 5, kind: output, shape index: {}]
  %s6 = sld [smem:[#allocation0]]
  $region57: #{tpu_custom_call.1} parent=0
    _
  %s8 = ssub.s32 1, %s6
  %s9 = scalar_select 0, %s8, %s6
  $region1: #{tpu_custom_call.1} parent=0
    #allocation2 [shape = 'u8[8192]{0}', space=vmem, size = 0x2000, scoped, tag = 'input window, operand 0']
    #allocation3 [shape = 's32[2]{0}', space=sflag, size = 0x8, scoped, tag = 'scoped memory for tpu_custom_call.1']
    #allocation4 [shape = 's32[2]{0}', space=sflag, size = 0x8, scoped, tag = 'scoped memory for tpu_custom_call.1']
    #allocation5 [shape = 'u8[8192]{0}', space=vmem, size = 0x2000, scoped, tag = 'output window, operand 0']
    %10 = vsyncpa [#allocation3], 0
    %s11 = scalar_lea.sflag [#allocation3], 1
    %12 = vsyncpa %s11, 0
    %13 = vsyncpa [#allocation4], 0
    %s14 = scalar_lea.sflag [#allocation4], 1
    %15 = vsyncpa %s14, 0
    loop: start=0, step=1, limit=4
    $region2: #{tpu_custom_call.1} parent=1 // loop_pre_header
      _
    $region3: #{tpu_custom_call.1} parent=1 // loop_header
      %s17 = sphi 0, %s21
      %p18 = scmp.ge.s32.totalorder %s17, 4
      %s27 = sphi 0, %s29
      %s30 = sphi 0, %s27
      %s31 = sphi 0, %s30
      %s47 = sphi 0, %s31
      %s51 = sphi 0, %s51
      %s53 = sphi 0, %s51
      %s54 = sphi 0, %s53
      %s68 = sphi 0, %s54
      %s72 = sphi 0, %s72
      %s74 = sphi 0, %s72
      %s75 = sphi 0, %s74
      %s89 = sphi 0, %s75
      %s93 = sphi 0, %s93
      %s95 = sphi 0, %s93
      %s96 = sphi 0, %s95
      %s110 = sphi 0, %s96
      %s114 = sphi 0, %s114
      %s116 = sphi 0, %s114
      %s117 = sphi 0, %s116
      %s131 = sphi 0, %s117
      %s137 = sphi 0, %s139
      %s140 = sphi 0, %s137
      %s141 = sphi 0, %s140
      %s157 = sphi 0, %s141
    $region4: #{tpu_custom_call.1} parent=1 // loop_header_branch
      %20 = sbr.rel (%p18) target = $region8
    $region5: #{tpu_custom_call.1} parent=1 // loop_body
      %s22 = ssub.s32 %s17, 1
      %s23 = ssub.s32 %s17, 2
      %s24 = sadd.s32 %s17, 1
      %s25 = ssub.s32 %s17, %s24
      %p26 = scmp.eq.s32.totalorder %s25, 0
      %s28 = sadd.s32 %s27, 1
      %s29 = scalar_select %p26, %s27, %s28
      %p32 = pneg %p26
      %p33 = scmp.eq.s32.totalorder %s17, 1
      %p34 = por %p32, %p33
      %p35 = scmp.ne.s32.totalorder %s27, %s30
      %p36 = scmp.eq.s32.totalorder %s17, 0
      %p37 = por %p35, %p36
      %p38 = scmp.ne.s32.totalorder %s27, %s30
      %p39 = scmp.eq.s32.totalorder %s22, 1
      %p40 = por %p38, %p39
      %p41 = scmp.ne.s32.totalorder %s30, %s31
      %p42 = scmp.eq.s32.totalorder %s22, 0
      %p43 = por %p41, %p42
      %p44 = scmp.ne.s32.totalorder %s30, %s31
      %p45 = scmp.eq.s32.totalorder %s23, 1
      %p46 = por %p44, %p45
      %p48 = scmp.ne.s32.totalorder %s31, %s47
      %p49 = scmp.eq.s32.totalorder %s23, 0
      %p50 = por %p48, %p49
      %s52 = sadd.s32 %s51, 1
      %p55 = scmp.eq.s32.totalorder %s17, 1
      %p56 = scmp.ne.s32.totalorder %s51, %s53
      %p57 = scmp.eq.s32.totalorder %s17, 0
      %p58 = por %p56, %p57
      %p59 = scmp.ne.s32.totalorder %s51, %s53
      %p60 = scmp.eq.s32.totalorder %s22, 1
      %p61 = por %p59, %p60
      %p62 = scmp.ne.s32.totalorder %s53, %s54
      %p63 = scmp.eq.s32.totalorder %s22, 0
      %p64 = por %p62, %p63
      %p65 = scmp.ne.s32.totalorder %s53, %s54
      %p66 = scmp.eq.s32.totalorder %s23, 1
      %p67 = por %p65, %p66
      %p69 = scmp.ne.s32.totalorder %s54, %s68
      %p70 = scmp.eq.s32.totalorder %s23, 0
      %p71 = por %p69, %p70
      %s73 = sadd.s32 %s72, 1
      %p76 = scmp.eq.s32.totalorder %s17, 1
      %p77 = scmp.ne.s32.totalorder %s72, %s74
      %p78 = scmp.eq.s32.totalorder %s17, 0
      %p79 = por %p77, %p78
      %p80 = scmp.ne.s32.totalorder %s72, %s74
      %p81 = scmp.eq.s32.totalorder %s22, 1
      %p82 = por %p80, %p81
      %p83 = scmp.ne.s32.totalorder %s74, %s75
      %p84 = scmp.eq.s32.totalorder %s22, 0
      %p85 = por %p83, %p84
      %p86 = scmp.ne.s32.totalorder %s74, %s75
      %p87 = scmp.eq.s32.totalorder %s23, 1
      %p88 = por %p86, %p87
      %p90 = scmp.ne.s32.totalorder %s75, %s89
      %p91 = scmp.eq.s32.totalorder %s23, 0
      %p92 = por %p90, %p91
      %s94 = sadd.s32 %s93, 1
      %p97 = scmp.eq.s32.totalorder %s17, 1
      %p98 = scmp.ne.s32.totalorder %s93, %s95
      %p99 = scmp.eq.s32.totalorder %s17, 0
      %p100 = por %p98, %p99
      %p101 = scmp.ne.s32.totalorder %s93, %s95
      %p102 = scmp.eq.s32.totalorder %s22, 1
      %p103 = por %p101, %p102
      %p104 = scmp.ne.s32.totalorder %s95, %s96
      %p105 = scmp.eq.s32.totalorder %s22, 0
      %p106 = por %p104, %p105
      %p107 = scmp.ne.s32.totalorder %s95, %s96
      %p108 = scmp.eq.s32.totalorder %s23, 1
      %p109 = por %p107, %p108
      %p111 = scmp.ne.s32.totalorder %s96, %s110
      %p112 = scmp.eq.s32.totalorder %s23, 0
      %p113 = por %p111, %p112
      %s115 = sadd.s32 %s114, 1
      %p118 = scmp.eq.s32.totalorder %s17, 1
      %p119 = scmp.ne.s32.totalorder %s114, %s116
      %p120 = scmp.eq.s32.totalorder %s17, 0
      %p121 = por %p119, %p120
      %p122 = scmp.ne.s32.totalorder %s114, %s116
      %p123 = scmp.eq.s32.totalorder %s22, 1
      %p124 = por %p122, %p123
      %p125 = scmp.ne.s32.totalorder %s116, %s117
      %p126 = scmp.eq.s32.totalorder %s22, 0
      %p127 = por %p125, %p126
      %p128 = scmp.ne.s32.totalorder %s116, %s117
      %p129 = scmp.eq.s32.totalorder %s23, 1
      %p130 = por %p128, %p129
      %p132 = scmp.ne.s32.totalorder %s117, %s131
      %p133 = scmp.eq.s32.totalorder %s23, 0
      %p134 = por %p132, %p133
      %s135 = ssub.s32 %s17, %s24
      %p136 = scmp.eq.s32.totalorder %s135, 0
      %s138 = sadd.s32 %s137, 1
      %s139 = scalar_select %p136, %s137, %s138
      %p142 = pneg %p136
      %p143 = scmp.eq.s32.totalorder %s17, 1
      %p144 = por %p142, %p143
      %p145 = scmp.ne.s32.totalorder %s137, %s140
      %p146 = scmp.eq.s32.totalorder %s17, 0
      %p147 = por %p145, %p146
      %p148 = scmp.ne.s32.totalorder %s137, %s140
      %p149 = scmp.eq.s32.totalorder %s22, 1
      %p150 = por %p148, %p149
      %p151 = scmp.ne.s32.totalorder %s140, %s141
      %p152 = scmp.eq.s32.totalorder %s22, 0
      %p153 = por %p151, %p152
      %p154 = scmp.ne.s32.totalorder %s140, %s141
      %p155 = scmp.eq.s32.totalorder %s23, 1
      %p156 = por %p154, %p155
      %p158 = scmp.ne.s32.totalorder %s141, %s157
      %p159 = scmp.eq.s32.totalorder %s23, 0
      %p160 = por %p158, %p159
      %p161 = scmp.le.s32.totalorder 1, %s17
      %p162 = scmp.lt.s32.totalorder %s17, 3
      %p163 = pnand %p161, %p162
      %p164 = pneg %p163
      // Predicated region
      $region9: #{tpu_custom_call.1} parent=5 // pred_check
        _
      $region10: #{tpu_custom_call.1} parent=5 // pred_check_branch
        %166 = sbr.rel (%p163) target = $region12
      $region11: #{tpu_custom_call.1} parent=5 // pred_region
        %s167 = ssub.s32 %s17, 1
        // Predicated region
        $region13: #{tpu_custom_call.1} parent=11 // pred_check
          %p168 = pneg %p64
        $region14: #{tpu_custom_call.1} parent=11 // pred_check_branch
          %170 = sbr.rel (%p168) target = $region16
        $region15: #{tpu_custom_call.1} parent=11 // pred_region
          _
        $region16: #{tpu_custom_call.1} parent=11 // pred_fallthru
          _
        // Predicated region
        $region17: #{tpu_custom_call.1} parent=11 // pred_check
          %p171 = pneg %p85
        $region18: #{tpu_custom_call.1} parent=11 // pred_check_branch
          %173 = sbr.rel (%p171) target = $region20
        $region19: #{tpu_custom_call.1} parent=11 // pred_region
          _
        $region20: #{tpu_custom_call.1} parent=11 // pred_fallthru
          _
        // Predicated region
        $region21: #{tpu_custom_call.1} parent=11 // pred_check
          %p174 = pneg %p106
        $region22: #{tpu_custom_call.1} parent=11 // pred_check_branch
          %176 = sbr.rel (%p174) target = $region24
        $region23: #{tpu_custom_call.1} parent=11 // pred_region
          _
        $region24: #{tpu_custom_call.1} parent=11 // pred_fallthru
          _
        // Predicated region
        $region25: #{tpu_custom_call.1} parent=11 // pred_check
          %p177 = pneg %p127
        $region26: #{tpu_custom_call.1} parent=11 // pred_check_branch
          %179 = sbr.rel (%p177) target = $region28
        $region27: #{tpu_custom_call.1} parent=11 // pred_region
          _
        $region28: #{tpu_custom_call.1} parent=11 // pred_fallthru
          _
      $region12: #{tpu_custom_call.1} parent=5 // pred_fallthru
        _
      %p180 = scmp.lt.s32.totalorder %s17, 2
      // Predicated region
      $region29: #{tpu_custom_call.1} parent=5 // pred_check
        %p181 = pneg %p180
      $region30: #{tpu_custom_call.1} parent=5 // pred_check_branch
        %183 = sbr.rel (%p181) target = $region32
      $region31: #{tpu_custom_call.1} parent=5 // pred_region
        // Predicated region
        $region33: #{tpu_custom_call.1} parent=31 // pred_check
          %p184 = pneg %p37
        $region34: #{tpu_custom_call.1} parent=31 // pred_check_branch
          %186 = sbr.rel (%p184) target = $region36
        $region35: #{tpu_custom_call.1} parent=31 // pred_region
          %s187 = sand.u32 %s27, 1
          %s188 = scalar_lea.sflag [#allocation3], %s187
          %s189 = sand.u32 %s27, 1
          %s190 = smul.addr %s189, 8
          %s191 = scalar_lea.vmem [#allocation2], %s190
          %s193 = ssub.s32 128, 128
          %194 = vsyncadd %s188, %s193
          %s195 = smul.addr %s17, 2
          %s196 = smul.addr %s195, 64
          %s197 = scalar_lea.hbm %s0, %s196
          %s199 = sshll.u32 %s191, 4
          %s200 = int_to_ptr.vmem [resolvable:$true] %s199
          %202 = dma.hbm_to_vmem [thread:$0]  %s197, 128, %s200, %s188
        $region36: #{tpu_custom_call.1} parent=31 // pred_fallthru
          _
      $region32: #{tpu_custom_call.1} parent=5 // pred_fallthru
        _
      %p203 = scmp.le.s32.totalorder 1, %s17
      %p204 = scmp.lt.s32.totalorder %s17, 3
      %p205 = pnand %p203, %p204
      %p206 = pneg %p205
      // Predicated region
      $region37: #{tpu_custom_call.1} parent=5 // pred_check
        _
      $region38: #{tpu_custom_call.1} parent=5 // pred_check_branch
        %208 = sbr.rel (%p205) target = $region40
      $region39: #{tpu_custom_call.1} parent=5 // pred_region
        %s209 = ssub.s32 %s17, 1
        %s210 = sand.u32 %s30, 1
        %s211 = scalar_lea.sflag [#allocation3], %s210
        %s212 = sand.u32 %s30, 1
        %s213 = smul.addr %s212, 8
        %s214 = scalar_lea.vmem [#allocation2], %s213
        // Predicated region
        $region41: #{tpu_custom_call.1} parent=39 // pred_check
          %p215 = pneg %p43
        $region42: #{tpu_custom_call.1} parent=39 // pred_check_branch
          %217 = sbr.rel (%p215) target = $region44
        $region43: #{tpu_custom_call.1} parent=39 // pred_region
          %218 = dma.done %s211, 128
        $region44: #{tpu_custom_call.1} parent=39 // pred_fallthru
          _
        %s219 = sand.u32 %s30, 1
        %s220 = scalar_lea.sflag [#allocation3], %s219
        %s221 = sand.u32 %s30, 1
        %s222 = smul.addr %s221, 8
        %s223 = scalar_lea.vmem [#allocation2], %s222
        %p224 = pneg %p43
        %p225 = pneg %p40
        %p226 = pneg %p64
        %p227 = pneg %p61
        %p228 = pneg %p85
        %p229 = pneg %p82
        %p230 = pneg %p106
        %p231 = pneg %p103
        %p232 = pneg %p127
        %p233 = pneg %p124
        %p234 = pneg %p153
        %p235 = pneg %p150
        %s236 = sand.u32 %s140, 1
        %s237 = scalar_lea.sflag [#allocation4], %s236
        %s238 = sand.u32 %s140, 1
        %s239 = smul.addr %s238, 8
        %s240 = scalar_lea.vmem [#allocation5], %s239
        %v241 = vld [vmem:[%s214] sm:$0xff]
        %v243 = vcombine.high %v241, %v241
        %245 = vmatprep.subr.mxu0 0.0
        %246 = vmatpush1.msra.mxu0 1.0
        %247 = vmatprep.subr.mxu0 0.0
        %248 = vmatpush1.msra.mxu0 1.0
        %249 = vmatprep.subr.mxu0 0.0
        %250 = vmatpush1.msra.mxu0 1.0
        %251 = vmatprep.subr.mxu0 0.0
        %252 = vmatpush1.msra.mxu0 1.0
        %253 = vmatprep.subr.mxu0 0.0
        %254 = vmatpush1.msra.mxu0 1.0
        %255 = vmatprep.subr.mxu0 0.0
        %256 = vmatpush1.msra.mxu0 1.0
        %257 = vmatprep.subr.mxu0 0.0
        %258 = vmatpush1.msra.mxu0 1.0
        %259 = vmatprep.subr.mxu0 0.0
        %260 = vmatpush1.msra.mxu0 1.0
        %261 = vmatprep.subr.mxu0 0.0
        %262 = vmatpush1.msra.mxu0 1.0
        %263 = vmatprep.subr.mxu0 0.0
        %264 = vmatpush1.msra.mxu0 1.0
        %265 = vmatprep.subr.mxu0 0.0
        %266 = vmatpush1.msra.mxu0 1.0
        %267 = vmatprep.subr.mxu0 0.0
        %268 = vmatpush1.msra.mxu0 1.0
        %269 = vmatprep.subr.mxu0 0.0
        %270 = vmatpush1.msra.mxu0 1.0
        %271 = vmatprep.subr.mxu0 0.0
        %272 = vmatpush1.msra.mxu0 1.0
        %273 = vmatprep.subr.mxu0 0.0
        %274 = vmatpush1.msra.mxu0 1.0
        %275 = vmatprep.subr.mxu0 0.0
        %276 = vmatpush1.msra.mxu0 1.0
        %277 = vmatprep.subr.mxu0 0.0
        %278 = vmatpush1.msra.mxu0 1.0
        %279 = vmatprep.subr.mxu0 0.0
        %280 = vmatpush1.msra.mxu0 1.0
        %281 = vmatprep.subr.mxu0 0.0
        %282 = vmatpush1.msra.mxu0 1.0
        %283 = vmatprep.subr.mxu0 0.0
        %284 = vmatpush1.msra.mxu0 1.0
        %285 = vmatprep.subr.mxu0 0.0
        %286 = vmatpush1.msra.mxu0 1.0
        %287 = vmatprep.subr.mxu0 0.0
        %288 = vmatpush1.msra.mxu0 1.0
        %289 = vmatprep.subr.mxu0 0.0
        %290 = vmatpush1.msra.mxu0 1.0
        %291 = vmatprep.subr.mxu0 0.0
        %292 = vmatpush1.msra.mxu0 1.0
        %293 = vmatprep.subr.mxu0 0.0
        %294 = vmatpush1.msra.mxu0 1.0
        %295 = vmatprep.subr.mxu0 0.0
        %296 = vmatpush1.msra.mxu0 1.0
        %297 = vmatprep.subr.mxu0 0.0
        %298 = vmatpush1.msra.mxu0 1.0
        %299 = vmatprep.subr.mxu0 0.0
        %300 = vmatpush1.msra.mxu0 1.0
        %301 = vmatprep.subr.mxu0 0.0
        %302 = vmatpush1.msra.mxu0 1.0
        %303 = vmatprep.subr.mxu0 0.0
        %304 = vmatpush1.msra.mxu0 1.0
        %305 = vmatprep.subr.mxu0 0.0
        %306 = vmatpush1.msra.mxu0 1.0
        %307 = vmatprep.subr.mxu0 0.0
        %308 = vmatpush1.msra.mxu0 1.0
        %309 = vmatprep.mubr.f32.mxu0 %v243
        %310 = vmatmul.mubr.f32.gmra.mrb[0].mxu0 %v241
        %v311 = vpop.f32.mrb[0].mxu0
        %v312 = vadd.f32 0.0, %v311
        %v313 = vpop.f32.mrb[0].mxu0
        %314 = vdwg.mxu0
        %v315 = vmul.f32 %v312, 0.00390625
        %v316 = vld [vmem:[%s1] sm:$0x3]
        %v317 = vld [vmem:[%s2] sm:$0x3]
        %vm318 = vcmask 31744
        %v320 = vsel %vm318, %v316, 0
        %vm322 = vcmask 1043456
        %v324 = vsel %vm322, %v315, 0
        %326 = vmatprep.subr.mxu0 0.0
        %327 = vmatpush1.msra.mxu0 %v324
        %328 = vmatprep.subr.mxu0 0.0
        %329 = vmatpush1.msra.mxu0 0.0
        %330 = vmatprep.subr.mxu0 0.0
        %331 = vmatpush1.msra.mxu0 0.0
        %332 = vmatprep.subr.mxu0 0.0
        %333 = vmatpush1.msra.mxu0 0.0
        %334 = vmatprep.subr.mxu0 0.0
        %335 = vmatpush1.msra.mxu0 0.0
        %336 = vmatprep.subr.mxu0 0.0
        %337 = vmatpush1.msra.mxu0 0.0
        %338 = vmatprep.subr.mxu0 0.0
        %339 = vmatpush1.msra.mxu0 0.0
        %340 = vmatprep.subr.mxu0 0.0
        %341 = vmatpush1.msra.mxu0 0.0
        %342 = vmatprep.subr.mxu0 0.0
        %343 = vmatpush1.msra.mxu0 0.0
        %344 = vmatprep.subr.mxu0 0.0
        %345 = vmatpush1.msra.mxu0 0.0
        %346 = vmatprep.subr.mxu0 0.0
        %347 = vmatpush1.msra.mxu0 0.0
        %348 = vmatprep.subr.mxu0 0.0
        %349 = vmatpush1.msra.mxu0 0.0
        %350 = vmatprep.subr.mxu0 0.0
        %351 = vmatpush1.msra.mxu0 0.0
        %352 = vmatprep.subr.mxu0 0.0
        %353 = vmatpush1.msra.mxu0 0.0
        %354 = vmatprep.subr.mxu0 0.0
        %355 = vmatpush1.msra.mxu0 0.0
        %356 = vmatprep.subr.mxu0 0.0
        %357 = vmatpush1.msra.mxu0 0.0
        %358 = vmatprep.subr.mxu0 0.0
        %359 = vmatpush1.msra.mxu0 0.0
        %360 = vmatprep.subr.mxu0 0.0
        %361 = vmatpush1.msra.mxu0 0.0
        %362 = vmatprep.subr.mxu0 0.0
        %363 = vmatpush1.msra.mxu0 0.0
        %364 = vmatprep.subr.mxu0 0.0
        %365 = vmatpush1.msra.mxu0 0.0
        %366 = vmatprep.subr.mxu0 0.0
        %367 = vmatpush1.msra.mxu0 0.0
        %368 = vmatprep.subr.mxu0 0.0
        %369 = vmatpush1.msra.mxu0 0.0
        %370 = vmatprep.subr.mxu0 0.0
        %371 = vmatpush1.msra.mxu0 0.0
        %372 = vmatprep.subr.mxu0 0.0
        %373 = vmatpush1.msra.mxu0 0.0
        %374 = vmatprep.subr.mxu0 0.0
        %375 = vmatpush1.msra.mxu0 0.0
        %376 = vmatprep.subr.mxu0 0.0
        %377 = vmatpush1.msra.mxu0 0.0
        %378 = vmatprep.subr.mxu0 0.0
        %379 = vmatpush1.msra.mxu0 0.0
        %380 = vmatprep.subr.mxu0 0.0
        %381 = vmatpush1.msra.mxu0 0.0
        %382 = vmatprep.subr.mxu0 0.0
        %383 = vmatpush1.msra.mxu0 0.0
        %384 = vmatprep.subr.mxu0 0.0
        %385 = vmatpush1.msra.mxu0 0.0
        %386 = vmatprep.subr.mxu0 0.0
        %387 = vmatpush1.msra.mxu0 0.0
        %388 = vmatprep.subr.mxu0 0.0
        %389 = vmatpush1.msra.mxu0 0.0
        %390 = vmatprep.mubr.f32.mxu0 0.0
        %391 = vmatmul.mubr.f32.gmra.mrb[0].mxu0 %v320
        %v392 = vpop.f32.mrb[0].mxu0
        %v393 = vadd.f32 %v317, %v392
        %v394 = vpop.f32.mrb[0].mxu0
        %395 = vdwg.mxu0
        %v396 = vmax.f32 %v393, 0.0
        %v397 = vld [vmem:[%s3] sm:$0xf]
        %v398 = vld [vmem:[%s4] sm:$0xf]
        %vm399 = vcmask 15360
        %v401 = vsel %vm399, %v397, 0
        %vm403 = vcmask 1041408
        %v405 = vsel %vm403, %v396, 0
        %407 = vmatprep.subr.mxu0 0.0
        %408 = vmatpush1.msra.mxu0 %v405
        %409 = vmatprep.subr.mxu0 0.0
        %410 = vmatpush1.msra.mxu0 0.0
        %411 = vmatprep.subr.mxu0 0.0
        %412 = vmatpush1.msra.mxu0 0.0
        %413 = vmatprep.subr.mxu0 0.0
        %414 = vmatpush1.msra.mxu0 0.0
        %415 = vmatprep.subr.mxu0 0.0
        %416 = vmatpush1.msra.mxu0 0.0
        %417 = vmatprep.subr.mxu0 0.0
        %418 = vmatpush1.msra.mxu0 0.0
        %419 = vmatprep.subr.mxu0 0.0
        %420 = vmatpush1.msra.mxu0 0.0
        %421 = vmatprep.subr.mxu0 0.0
        %422 = vmatpush1.msra.mxu0 0.0
        %423 = vmatprep.subr.mxu0 0.0
        %424 = vmatpush1.msra.mxu0 0.0
        %425 = vmatprep.subr.mxu0 0.0
        %426 = vmatpush1.msra.mxu0 0.0
        %427 = vmatprep.subr.mxu0 0.0
        %428 = vmatpush1.msra.mxu0 0.0
        %429 = vmatprep.subr.mxu0 0.0
        %430 = vmatpush1.msra.mxu0 0.0
        %431 = vmatprep.subr.mxu0 0.0
        %432 = vmatpush1.msra.mxu0 0.0
        %433 = vmatprep.subr.mxu0 0.0
        %434 = vmatpush1.msra.mxu0 0.0
        %435 = vmatprep.subr.mxu0 0.0
        %436 = vmatpush1.msra.mxu0 0.0
        %437 = vmatprep.subr.mxu0 0.0
        %438 = vmatpush1.msra.mxu0 0.0
        %439 = vmatprep.subr.mxu0 0.0
        %440 = vmatpush1.msra.mxu0 0.0
        %441 = vmatprep.subr.mxu0 0.0
        %442 = vmatpush1.msra.mxu0 0.0
        %443 = vmatprep.subr.mxu0 0.0
        %444 = vmatpush1.msra.mxu0 0.0
        %445 = vmatprep.subr.mxu0 0.0
        %446 = vmatpush1.msra.mxu0 0.0
        %447 = vmatprep.subr.mxu0 0.0
        %448 = vmatpush1.msra.mxu0 0.0
        %449 = vmatprep.subr.mxu0 0.0
        %450 = vmatpush1.msra.mxu0 0.0
        %451 = vmatprep.subr.mxu0 0.0
        %452 = vmatpush1.msra.mxu0 0.0
        %453 = vmatprep.subr.mxu0 0.0
        %454 = vmatpush1.msra.mxu0 0.0
        %455 = vmatprep.subr.mxu0 0.0
        %456 = vmatpush1.msra.mxu0 0.0
        %457 = vmatprep.subr.mxu0 0.0
        %458 = vmatpush1.msra.mxu0 0.0
        %459 = vmatprep.subr.mxu0 0.0
        %460 = vmatpush1.msra.mxu0 0.0
        %461 = vmatprep.subr.mxu0 0.0
        %462 = vmatpush1.msra.mxu0 0.0
        %463 = vmatprep.subr.mxu0 0.0
        %464 = vmatpush1.msra.mxu0 0.0
        %465 = vmatprep.subr.mxu0 0.0
        %466 = vmatpush1.msra.mxu0 0.0
        %467 = vmatprep.subr.mxu0 0.0
        %468 = vmatpush1.msra.mxu0 0.0
        %469 = vmatprep.subr.mxu0 0.0
        %470 = vmatpush1.msra.mxu0 0.0
        %471 = vmatprep.mubr.f32.mxu0 0.0
        %472 = vmatmul.mubr.f32.gmra.mrb[0].mxu0 %v401
        %v473 = vpop.f32.mrb[0].mxu0
        %v474 = vadd.f32 %v398, %v473
        %v475 = vpop.f32.mrb[0].mxu0
        %476 = vdwg.mxu0
        %v477 = vxor.u32 %v474, 2147483648
        %v478 = vmul.f32 %v477, 1.442695
        %v479 = vpow.pop %v478
        %v480 = vadd.f32 %v479, 1.0
        %v481 = vrcp.pop %v480
        %v482 = vmul.f32 1.0, %v481
        %484 = vset.pattern.permute.xlu0 0
        %485 = vperm.xlu0 %484, %v482
        %v486 = vpop.permute.xlu0 %485
        %v488 = vunpack.c.l.s4 839922192
        %v489 = vunpack.c.0.s8 %v488
        %v490 = vlaneseq
        %v491 = vshrl.u32 %v490, 7
        %v492 = vsub.s32 %v489, %v491
        %v493 = vrot.slane %v486, %v492
        %v495 = vmul.f32 %v241, %v493
        %496 = vst [vmem:[%s240] sm:$0xff] %v495
        %s497 = sand.u32 %s140, 1
        %s498 = scalar_lea.sflag [#allocation4], %s497
        %s499 = sand.u32 %s140, 1
        %s500 = smul.addr %s499, 8
        %s501 = scalar_lea.vmem [#allocation5], %s500
        // Predicated region
        $region45: #{tpu_custom_call.1} parent=39 // pred_check
          %p502 = pneg %p150
        $region46: #{tpu_custom_call.1} parent=39 // pred_check_branch
          %504 = sbr.rel (%p502) target = $region48
        $region47: #{tpu_custom_call.1} parent=39 // pred_region
          %s506 = ssub.s32 128, 128
          %507 = vsyncadd %s498, %s506
          %s508 = smul.addr %s22, 2
          %s509 = smul.addr %s508, 64
          %s510 = scalar_lea.hbm %s5, %s509
          %s512 = sshll.u32 %s501, 4
          %s513 = int_to_ptr.vmem [resolvable:$true] %s512
          %515 = dma.vmem_to_hbm [thread:$0]  %s513, 128, %s510, %s498
        $region48: #{tpu_custom_call.1} parent=39 // pred_fallthru
          _
      $region40: #{tpu_custom_call.1} parent=5 // pred_fallthru
        _
      %p516 = scmp.le.s32.totalorder 2, %s17
      // Predicated region
      $region49: #{tpu_custom_call.1} parent=5 // pred_check
        %p517 = pneg %p516
      $region50: #{tpu_custom_call.1} parent=5 // pred_check_branch
        %519 = sbr.rel (%p517) target = $region52
      $region51: #{tpu_custom_call.1} parent=5 // pred_region
        %s520 = ssub.s32 %s17, 2
        // Predicated region
        $region53: #{tpu_custom_call.1} parent=51 // pred_check
          %p521 = pneg %p156
        $region54: #{tpu_custom_call.1} parent=51 // pred_check_branch
          %523 = sbr.rel (%p521) target = $region56
        $region55: #{tpu_custom_call.1} parent=51 // pred_region
          %s524 = sand.u32 %s141, 1
          %s525 = scalar_lea.sflag [#allocation4], %s524
          %s526 = sand.u32 %s141, 1
          %s527 = smul.addr %s526, 8
          %s528 = scalar_lea.vmem [#allocation5], %s527
          %529 = dma.done %s525, 128
        $region56: #{tpu_custom_call.1} parent=51 // pred_fallthru
          _
      $region52: #{tpu_custom_call.1} parent=5 // pred_fallthru
        _
    $region6: #{tpu_custom_call.1} parent=1 // loop_footer
      %s21 = sadd.s32 1, %s17
    $region7: #{tpu_custom_call.1} parent=1 // loop_footer_branch
      %16 = sbr.rel target = $region3
    $region8: #{tpu_custom_call.1} parent=1 // loop_exit
      _
    %530 = vsyncpa [#allocation3], 1
    %s531 = scalar_lea.sflag [#allocation3], 1
    %532 = vsyncpa %s531, 1
    %533 = vsyncpa [#allocation4], 1
    %s534 = scalar_lea.sflag [#allocation4], 1
    %535 = vsyncpa %s534, 1

</llo_original>
